<compile_context>
chip_gen: v7x
topology: tpu7x:2x2x1
jax: 0.10.0
libtpu: 0.0.40
codegen_flags: <defaults>
</compile_context>

<pallas_src>
import functools

import jax
import jax.numpy as jnp
import numpy as np
from jax import lax
from jax.experimental import pallas as pl
from jax.experimental.pallas import tpu as pltpu


def _agg_sep_kernel(lab_ref, xc_ref, xa_ref, labc_ref,
                    inner_ref, outer_ref, pen_ref,
                    xa_f32_ref, *, ta, constraint):
    """One grid point = (compare-row tile c, anchor-row tile a).

    grid axis 0 (c): independent compare-row tiles      -> "parallel"
    grid axis 1 (a): reduction over anchor-row tiles    -> "arbitrary" (last)

    Outputs are per-compare-row partial sums (index_map ignores `a`, so the
    output blocks stay resident in VMEM across the reduction axis and are
    accumulated in place).
    """
    a = pl.program_id(1)

    # ---- init + per-compare-tile-only work (first anchor tile) -------------
    @pl.when(a == 0)
    def _():
        inner_ref[...] = jnp.zeros_like(inner_ref)
        outer_ref[...] = jnp.zeros_like(outer_ref)
        xc0 = xc_ref[...].astype(jnp.float32)
        norms = jnp.sqrt(jnp.sum(xc0 * xc0, axis=1, keepdims=True))      # (TC, 1)
        pen_ref[...] = (norms - jnp.float32(constraint)) ** 2

    # ---- one-time f32 casts for this grid step ------------------------------
    # Anchor tile goes to a VMEM scratch so each fori iteration is a plain
    # f32 row load (no per-iteration dtype cast, no stride-0 tricks).
    xa_f32_ref[...] = xa_ref[...].astype(jnp.float32)                    # (TA, D)
    xc = xc_ref[...].astype(jnp.float32)                                 # (TC, D)
    labc = labc_ref[...]                                                 # (TC, 1) i32
    tc = labc.shape[0]

    def body(i, carry):
        inner_vec, outer_vec = carry
        xi = xa_f32_ref[pl.ds(i, 1), :]                 # (1, D) f32 anchor row
        diff = xc - xi                                  # (TC, D) broadcast sub
        ad = jnp.abs(diff)
        c1 = jnp.minimum(ad, jnp.float32(1.0))          # select-free SmoothL1
        sl1 = c1 * (ad - jnp.float32(0.5) * c1)
        row = jnp.sum(sl1, axis=1, keepdims=True)       # (TC, 1): sum over D
        lab_i = lab_ref[a * ta + i]                     # scalar SMEM label read
        same = (labc == lab_i).astype(jnp.float32)      # (TC, 1)
        masked = row * same
        # outer accumulated directly (no total-minus-inner cancellation)
        return inner_vec + masked, outer_vec + (row - masked)

    zeros = jnp.zeros((tc, 1), jnp.float32)
    unroll = ta if ta <= 16 else 8
    inner_vec, outer_vec = lax.fori_loop(0, ta, body, (zeros, zeros), unroll=unroll)

    inner_ref[...] += inner_vec
    outer_ref[...] += outer_vec


def _pick_block(n, cap):
    """Largest divisor of n that is <= cap and sublane-friendly; else n."""
    if n <= cap:
        return n
    for t in range(cap, 0, -1):
        if n % t == 0 and t % 8 == 0:
            return t
    return n


def aggregation_separation_loss(distributions, labels, constraint=10.0,
                                block_anchor=None, block_compare=None):
    n, d = distributions.shape
    lab1d = jnp.asarray(labels).reshape(n).astype(jnp.int32)   # SMEM (scalar reads)
    lab2d = lab1d.reshape(n, 1)                                # VMEM (vector compare)

    # Row-tile caps keep (double-buffered input tiles + f32 scratch) well under
    # the scoped-VMEM defaults on v5e (16 MiB) / v6e (32 MiB) / v7x (32 MiB).
    ta = block_anchor if block_anchor is not None else _pick_block(n, 256)
    tc = block_compare if block_compare is not None else _pick_block(n, 512)
    assert n % ta == 0 and n % tc == 0, "block sizes must divide N"

    kernel = functools.partial(_agg_sep_kernel, ta=ta, constraint=float(constraint))

    grid = (n // tc, n // ta)   # (compare tiles [parallel], anchor tiles [reduction])

    inner_rows, outer_rows, pen_rows = pl.pallas_call(
        kernel,
        out_shape=(
            jax.ShapeDtypeStruct((n, 1), jnp.float32),   # per-row inner partials
            jax.ShapeDtypeStruct((n, 1), jnp.float32),   # per-row outer partials
            jax.ShapeDtypeStruct((n, 1), jnp.float32),   # per-row norm penalty
        ),
        grid=grid,
        in_specs=[
            pl.BlockSpec(memory_space=pltpu.SMEM),            # labels (N,) -> SMEM
            pl.BlockSpec((tc, d), lambda c, a: (c, 0)),       # compare-row tile
            pl.BlockSpec((ta, d), lambda c, a: (a, 0)),       # anchor-row tile
            pl.BlockSpec((tc, 1), lambda c, a: (c, 0)),       # compare labels column
        ],
        out_specs=(
            pl.BlockSpec((tc, 1), lambda c, a: (c, 0)),
            pl.BlockSpec((tc, 1), lambda c, a: (c, 0)),
            pl.BlockSpec((tc, 1), lambda c, a: (c, 0)),
        ),
        scratch_shapes=[pltpu.VMEM((ta, d), jnp.float32)],     # one-time f32 cast
        compiler_params=pltpu.CompilerParams(
            dimension_semantics=("parallel", "arbitrary")),
    )(lab1d, distributions, distributions, lab2d)

    # Pair counts depend only on labels (kept out of the kernel per perf review).
    n_same = jnp.sum(lab1d[:, None] == lab1d[None, :])
    n_diff = n * n - n_same

    inv_d = jnp.float32(1.0 / d)               # SmoothL1 reduction='mean' over D
    inner_sum = jnp.sum(inner_rows) * inv_d
    outer_sum = jnp.sum(outer_rows) * inv_d

    loss_inner = inner_sum / n_same.astype(jnp.float32)        # n_same >= N > 0
    loss_outer = jnp.where(
        n_diff > 0,
        outer_sum / jnp.maximum(n_diff, 1).astype(jnp.float32),
        jnp.float32(0.0))                                      # torch `if n2 != 0` guard
    loss_penalty = jnp.sum(pen_rows) * jnp.float32(1.0 / n)
    return loss_inner, loss_outer, loss_penalty


def reference(x, labels, constraint=10.0):
    # Pure-JAX reference matching the PyTorch forward (SmoothL1, reduction='mean').
    x = x.astype(jnp.float32)
    diff = x[:, None, :] - x[None, :, :]
    ad = jnp.abs(diff)
    sl1 = jnp.where(ad < 1.0, 0.5 * diff * diff, ad - 0.5)
    M = jnp.mean(sl1, axis=-1)
    same = labels[:, None] == labels[None, :]
    n1 = jnp.sum(same)
    n2 = same.size - n1
    inner = jnp.sum(jnp.where(same, M, 0.0)) / n1
    outer = jnp.where(
        n2 > 0, jnp.sum(jnp.where(same, 0.0, M)) / jnp.maximum(n2, 1), 0.0)
    norms = jnp.sqrt(jnp.sum(x * x, axis=1))
    pen = jnp.mean((norms - constraint) ** 2)
    return inner, outer, pen


if __name__ == "__main__":
    key = jax.random.PRNGKey(0)
    k1, k2 = jax.random.split(key)
    N, D = 16, 32
    distributions = jax.random.normal(k1, (N, D), dtype=jnp.float32) * 3.0
    labels = jax.random.randint(k2, (N,), 0, 3, dtype=jnp.int32)

    # Block sizes of 8 exercise the full 2-D (compare, anchor) grid + P3 init/accumulate.
    out = aggregation_separation_loss(distributions, labels, constraint=10.0,
                                      block_anchor=8, block_compare=8)
    out = jax.block_until_ready(out)

    ref = reference(distributions, labels, constraint=10.0)
    for a, b in zip(out, ref):
        np.testing.assert_allclose(np.asarray(a), np.asarray(b), rtol=1e-5, atol=1e-5)

    print("KERNEL_OK")
</pallas_src>

<mosaic_0001>
module attributes {stable_mosaic.version = 11 : i64} {
  func.func @_agg_sep_kernel(%arg0: i32, %arg1: i32, %arg2: memref<16xi32, #tpu.memory_space<smem>>, %arg3: memref<8x32xf32, #tpu.memory_space<vmem>>, %arg4: memref<8x32xf32, #tpu.memory_space<vmem>>, %arg5: memref<8x1xi32, #tpu.memory_space<vmem>>, %arg6: memref<8x1xf32, #tpu.memory_space<vmem>>, %arg7: memref<8x1xf32, #tpu.memory_space<vmem>>, %arg8: memref<8x1xf32, #tpu.memory_space<vmem>>, %arg9: memref<8x32xf32, #tpu.memory_space<vmem>>) attributes {dimension_semantics = [#tpu.dimension_semantics<parallel>, #tpu.dimension_semantics<arbitrary>], iteration_bounds = array<i64: 2, 2>, scalar_prefetch = 0 : i64, scratch_operands = 1 : i64, tpu.core_type = #tpu.core_type<tc>, window_params = [{transform_indices = @transform_0, window_bounds = array<i64: 16>}, {transform_indices = @transform_1, window_bounds = array<i64: 8, 32>}, {transform_indices = @transform_2, window_bounds = array<i64: 8, 32>}, {transform_indices = @transform_3, window_bounds = array<i64: 8, 1>}, {transform_indices = @transform_4, window_bounds = array<i64: 8, 1>}, {transform_indices = @transform_5, window_bounds = array<i64: 8, 1>}, {transform_indices = @transform_6, window_bounds = array<i64: 8, 1>}]} {
    %c0_i32 = arith.constant 0 : i32
    %0 = arith.cmpi eq, %arg1, %c0_i32 : i32
    %1 = arith.extui %0 : i1 to i32
    %c0_i32_0 = arith.constant 0 : i32
    %2 = arith.cmpi ne, %1, %c0_i32_0 : i32
    scf.if %2 {
      %cst_57 = arith.constant 0.000000e+00 : f32
      %214 = vector.broadcast %cst_57 : f32 to vector<8x1xf32>
      %c0_58 = arith.constant 0 : index
      %c0_59 = arith.constant 0 : index
      %215 = vector.load %arg6[%c0_58, %c0_59] : memref<8x1xf32, #tpu.memory_space<vmem>>, vector<8x1xf32>
      tpu.vector_store %arg6[%c0_58, %c0_59], %214 {strides = array<i32>} : memref<8x1xf32, #tpu.memory_space<vmem>>, vector<8x1xf32>,
      %cst_60 = arith.constant 0.000000e+00 : f32
      %216 = vector.broadcast %cst_60 : f32 to vector<8x1xf32>
      %c0_61 = arith.constant 0 : index
      %c0_62 = arith.constant 0 : index
      %217 = vector.load %arg7[%c0_61, %c0_62] : memref<8x1xf32, #tpu.memory_space<vmem>>, vector<8x1xf32>
      tpu.vector_store %arg7[%c0_61, %c0_62], %216 {strides = array<i32>} : memref<8x1xf32, #tpu.memory_space<vmem>>, vector<8x1xf32>,
      %c0_63 = arith.constant 0 : index
      %c0_64 = arith.constant 0 : index
      %218 = vector.load %arg3[%c0_63, %c0_64] : memref<8x32xf32, #tpu.memory_space<vmem>>, vector<8x32xf32>
      %219 = arith.mulf %218, %218 : vector<8x32xf32>
      %cst_65 = arith.constant dense<0.000000e+00> : vector<8xf32>
      %220 = vector.multi_reduction <add>, %219, %cst_65 [1] : vector<8x32xf32> to vector<8xf32>
      %221 = vector.shape_cast %220 : vector<8xf32> to vector<8x1xf32>
      %222 = math.sqrt %221 : vector<8x1xf32>
      %cst_66 = arith.constant 1.000000e+01 : f32
      %223 = vector.broadcast %cst_66 : f32 to vector<8x1xf32>
      %224 = arith.subf %222, %223 : vector<8x1xf32>
      %225 = arith.mulf %224, %224 : vector<8x1xf32>
      %c0_67 = arith.constant 0 : index
      %c0_68 = arith.constant 0 : index
      %226 = vector.load %arg8[%c0_67, %c0_68] : memref<8x1xf32, #tpu.memory_space<vmem>>, vector<8x1xf32>
      tpu.vector_store %arg8[%c0_67, %c0_68], %225 {strides = array<i32>} : memref<8x1xf32, #tpu.memory_space<vmem>>, vector<8x1xf32>,
    } else {
    }
    %c0 = arith.constant 0 : index
    %c0_1 = arith.constant 0 : index
    %3 = vector.load %arg4[%c0, %c0_1] : memref<8x32xf32, #tpu.memory_space<vmem>>, vector<8x32xf32>
    %c0_2 = arith.constant 0 : index
    %c0_3 = arith.constant 0 : index
    %4 = vector.load %arg9[%c0_2, %c0_3] : memref<8x32xf32, #tpu.memory_space<vmem>>, vector<8x32xf32>
    tpu.vector_store %arg9[%c0_2, %c0_3], %3 {strides = array<i32>} : memref<8x32xf32, #tpu.memory_space<vmem>>, vector<8x32xf32>,
    %c0_4 = arith.constant 0 : index
    %c0_5 = arith.constant 0 : index
    %5 = vector.load %arg3[%c0_4, %c0_5] : memref<8x32xf32, #tpu.memory_space<vmem>>, vector<8x32xf32>
    %c0_6 = arith.constant 0 : index
    %c0_7 = arith.constant 0 : index
    %6 = vector.load %arg5[%c0_6, %c0_7] : memref<8x1xi32, #tpu.memory_space<vmem>>, vector<8x1xi32>
    %cst = arith.constant 0.000000e+00 : f32
    %7 = vector.broadcast %cst : f32 to vector<8x1xf32>
    %c0_i32_8 = arith.constant 0 : i32
    %8 = arith.index_cast %c0_i32_8 : i32 to index
    %c0_9 = arith.constant 0 : index
    %9 = vector.load %arg9[%8, %c0_9] : memref<8x32xf32, #tpu.memory_space<vmem>>, vector<1x32xf32>
    %10 = vector.broadcast %9 : vector<1x32xf32> to vector<8x32xf32>
    %11 = arith.subf %5, %10 : vector<8x32xf32>
    %12 = math.absf %11 : vector<8x32xf32>
    %cst_10 = arith.constant 1.000000e+00 : f32
    %13 = vector.broadcast %cst_10 : f32 to vector<8x32xf32>
    %14 = arith.minimumf %12, %13 : vector<8x32xf32>
    %cst_11 = arith.constant 5.000000e-01 : f32
    %15 = vector.broadcast %cst_11 : f32 to vector<8x32xf32>
    %16 = arith.mulf %15, %14 : vector<8x32xf32>
    %17 = arith.subf %12, %16 : vector<8x32xf32>
    %18 = arith.mulf %14, %17 : vector<8x32xf32>
    %cst_12 = arith.constant dense<0.000000e+00> : vector<8xf32>
    %19 = vector.multi_reduction <add>, %18, %cst_12 [1] : vector<8x32xf32> to vector<8xf32>
    %20 = vector.shape_cast %19 : vector<8xf32> to vector<8x1xf32>
    %c8_i32 = arith.constant 8 : i32
    %21 = arith.muli %arg1, %c8_i32 : i32
    %22 = arith.addi %21, %c0_i32_8 : i32
    %23 = arith.index_cast %22 : i32 to index
    %24 = memref.load %arg2[%23] : memref<16xi32, #tpu.memory_space<smem>>
    %25 = vector.broadcast %24 : i32 to vector<8x1xi32>
    %26 = arith.cmpi eq, %6, %25 : vector<8x1xi32>
    %27 = arith.extui %26 : vector<8x1xi1> to vector<8x1xi32>
    %28 = arith.sitofp %27 : vector<8x1xi32> to vector<8x1xf32>
    %29 = arith.mulf %20, %28 : vector<8x1xf32>
    %30 = arith.addf %7, %29 : vector<8x1xf32>
    %31 = arith.subf %20, %29 : vector<8x1xf32>
    %32 = arith.addf %7, %31 : vector<8x1xf32>
    %c1_i32 = arith.constant 1 : i32
    %33 = arith.index_cast %c1_i32 : i32 to index
    %c0_13 = arith.constant 0 : index
    %34 = vector.load %arg9[%33, %c0_13] : memref<8x32xf32, #tpu.memory_space<vmem>>, vector<1x32xf32>
    %35 = vector.broadcast %34 : vector<1x32xf32> to vector<8x32xf32>
    %36 = arith.subf %5, %35 : vector<8x32xf32>
    %37 = math.absf %36 : vector<8x32xf32>
    %cst_14 = arith.constant 1.000000e+00 : f32
    %38 = vector.broadcast %cst_14 : f32 to vector<8x32xf32>
    %39 = arith.minimumf %37, %38 : vector<8x32xf32>
    %cst_15 = arith.constant 5.000000e-01 : f32
    %40 = vector.broadcast %cst_15 : f32 to vector<8x32xf32>
    %41 = arith.mulf %40, %39 : vector<8x32xf32>
    %42 = arith.subf %37, %41 : vector<8x32xf32>
    %43 = arith.mulf %39, %42 : vector<8x32xf32>
    %cst_16 = arith.constant dense<0.000000e+00> : vector<8xf32>
    %44 = vector.multi_reduction <add>, %43, %cst_16 [1] : vector<8x32xf32> to vector<8xf32>
    %45 = vector.shape_cast %44 : vector<8xf32> to vector<8x1xf32>
    %c8_i32_17 = arith.constant 8 : i32
    %46 = arith.muli %arg1, %c8_i32_17 : i32
    %47 = arith.addi %46, %c1_i32 : i32
    %48 = arith.index_cast %47 : i32 to index
    %49 = memref.load %arg2[%48] : memref<16xi32, #tpu.memory_space<smem>>
    %50 = vector.broadcast %49 : i32 to vector<8x1xi32>
    %51 = arith.cmpi eq, %6, %50 : vector<8x1xi32>
    %52 = arith.extui %51 : vector<8x1xi1> to vector<8x1xi32>
    %53 = arith.sitofp %52 : vector<8x1xi32> to vector<8x1xf32>
    %54 = arith.mulf %45, %53 : vector<8x1xf32>
    %55 = arith.addf %30, %54 : vector<8x1xf32>
    %56 = arith.subf %45, %54 : vector<8x1xf32>
    %57 = arith.addf %32, %56 : vector<8x1xf32>
    %c2_i32 = arith.constant 2 : i32
    %58 = arith.index_cast %c2_i32 : i32 to index
    %c0_18 = arith.constant 0 : index
    %59 = vector.load %arg9[%58, %c0_18] : memref<8x32xf32, #tpu.memory_space<vmem>>, vector<1x32xf32>
    %60 = vector.broadcast %59 : vector<1x32xf32> to vector<8x32xf32>
    %61 = arith.subf %5, %60 : vector<8x32xf32>
    %62 = math.absf %61 : vector<8x32xf32>
    %cst_19 = arith.constant 1.000000e+00 : f32
    %63 = vector.broadcast %cst_19 : f32 to vector<8x32xf32>
    %64 = arith.minimumf %62, %63 : vector<8x32xf32>
    %cst_20 = arith.constant 5.000000e-01 : f32
    %65 = vector.broadcast %cst_20 : f32 to vector<8x32xf32>
    %66 = arith.mulf %65, %64 : vector<8x32xf32>
    %67 = arith.subf %62, %66 : vector<8x32xf32>
    %68 = arith.mulf %64, %67 : vector<8x32xf32>
    %cst_21 = arith.constant dense<0.000000e+00> : vector<8xf32>
    %69 = vector.multi_reduction <add>, %68, %cst_21 [1] : vector<8x32xf32> to vector<8xf32>
    %70 = vector.shape_cast %69 : vector<8xf32> to vector<8x1xf32>
    %c8_i32_22 = arith.constant 8 : i32
    %71 = arith.muli %arg1, %c8_i32_22 : i32
    %72 = arith.addi %71, %c2_i32 : i32
    %73 = arith.index_cast %72 : i32 to index
    %74 = memref.load %arg2[%73] : memref<16xi32, #tpu.memory_space<smem>>
    %75 = vector.broadcast %74 : i32 to vector<8x1xi32>
    %76 = arith.cmpi eq, %6, %75 : vector<8x1xi32>
    %77 = arith.extui %76 : vector<8x1xi1> to vector<8x1xi32>
    %78 = arith.sitofp %77 : vector<8x1xi32> to vector<8x1xf32>
    %79 = arith.mulf %70, %78 : vector<8x1xf32>
    %80 = arith.addf %55, %79 : vector<8x1xf32>
    %81 = arith.subf %70, %79 : vector<8x1xf32>
    %82 = arith.addf %57, %81 : vector<8x1xf32>
    %c3_i32 = arith.constant 3 : i32
    %83 = arith.index_cast %c3_i32 : i32 to index
    %c0_23 = arith.constant 0 : index
    %84 = vector.load %arg9[%83, %c0_23] : memref<8x32xf32, #tpu.memory_space<vmem>>, vector<1x32xf32>
    %85 = vector.broadcast %84 : vector<1x32xf32> to vector<8x32xf32>
    %86 = arith.subf %5, %85 : vector<8x32xf32>
    %87 = math.absf %86 : vector<8x32xf32>
    %cst_24 = arith.constant 1.000000e+00 : f32
    %88 = vector.broadcast %cst_24 : f32 to vector<8x32xf32>
    %89 = arith.minimumf %87, %88 : vector<8x32xf32>
    %cst_25 = arith.constant 5.000000e-01 : f32
    %90 = vector.broadcast %cst_25 : f32 to vector<8x32xf32>
    %91 = arith.mulf %90, %89 : vector<8x32xf32>
    %92 = arith.subf %87, %91 : vector<8x32xf32>
    %93 = arith.mulf %89, %92 : vector<8x32xf32>
    %cst_26 = arith.constant dense<0.000000e+00> : vector<8xf32>
    %94 = vector.multi_reduction <add>, %93, %cst_26 [1] : vector<8x32xf32> to vector<8xf32>
    %95 = vector.shape_cast %94 : vector<8xf32> to vector<8x1xf32>
    %c8_i32_27 = arith.constant 8 : i32
    %96 = arith.muli %arg1, %c8_i32_27 : i32
    %97 = arith.addi %96, %c3_i32 : i32
    %98 = arith.index_cast %97 : i32 to index
    %99 = memref.load %arg2[%98] : memref<16xi32, #tpu.memory_space<smem>>
    %100 = vector.broadcast %99 : i32 to vector<8x1xi32>
    %101 = arith.cmpi eq, %6, %100 : vector<8x1xi32>
    %102 = arith.extui %101 : vector<8x1xi1> to vector<8x1xi32>
    %103 = arith.sitofp %102 : vector<8x1xi32> to vector<8x1xf32>
    %104 = arith.mulf %95, %103 : vector<8x1xf32>
    %105 = arith.addf %80, %104 : vector<8x1xf32>
    %106 = arith.subf %95, %104 : vector<8x1xf32>
    %107 = arith.addf %82, %106 : vector<8x1xf32>
    %c4_i32 = arith.constant 4 : i32
    %108 = arith.index_cast %c4_i32 : i32 to index
    %c0_28 = arith.constant 0 : index
    %109 = vector.load %arg9[%108, %c0_28] : memref<8x32xf32, #tpu.memory_space<vmem>>, vector<1x32xf32>
    %110 = vector.broadcast %109 : vector<1x32xf32> to vector<8x32xf32>
    %111 = arith.subf %5, %110 : vector<8x32xf32>
    %112 = math.absf %111 : vector<8x32xf32>
    %cst_29 = arith.constant 1.000000e+00 : f32
    %113 = vector.broadcast %cst_29 : f32 to vector<8x32xf32>
    %114 = arith.minimumf %112, %113 : vector<8x32xf32>
    %cst_30 = arith.constant 5.000000e-01 : f32
    %115 = vector.broadcast %cst_30 : f32 to vector<8x32xf32>
    %116 = arith.mulf %115, %114 : vector<8x32xf32>
    %117 = arith.subf %112, %116 : vector<8x32xf32>
    %118 = arith.mulf %114, %117 : vector<8x32xf32>
    %cst_31 = arith.constant dense<0.000000e+00> : vector<8xf32>
    %119 = vector.multi_reduction <add>, %118, %cst_31 [1] : vector<8x32xf32> to vector<8xf32>
    %120 = vector.shape_cast %119 : vector<8xf32> to vector<8x1xf32>
    %c8_i32_32 = arith.constant 8 : i32
    %121 = arith.muli %arg1, %c8_i32_32 : i32
    %122 = arith.addi %121, %c4_i32 : i32
    %123 = arith.index_cast %122 : i32 to index
    %124 = memref.load %arg2[%123] : memref<16xi32, #tpu.memory_space<smem>>
    %125 = vector.broadcast %124 : i32 to vector<8x1xi32>
    %126 = arith.cmpi eq, %6, %125 : vector<8x1xi32>
    %127 = arith.extui %126 : vector<8x1xi1> to vector<8x1xi32>
    %128 = arith.sitofp %127 : vector<8x1xi32> to vector<8x1xf32>
    %129 = arith.mulf %120, %128 : vector<8x1xf32>
    %130 = arith.addf %105, %129 : vector<8x1xf32>
    %131 = arith.subf %120, %129 : vector<8x1xf32>
    %132 = arith.addf %107, %131 : vector<8x1xf32>
    %c5_i32 = arith.constant 5 : i32
    %133 = arith.index_cast %c5_i32 : i32 to index
    %c0_33 = arith.constant 0 : index
    %134 = vector.load %arg9[%133, %c0_33] : memref<8x32xf32, #tpu.memory_space<vmem>>, vector<1x32xf32>
    %135 = vector.broadcast %134 : vector<1x32xf32> to vector<8x32xf32>
    %136 = arith.subf %5, %135 : vector<8x32xf32>
    %137 = math.absf %136 : vector<8x32xf32>
    %cst_34 = arith.constant 1.000000e+00 : f32
    %138 = vector.broadcast %cst_34 : f32 to vector<8x32xf32>
    %139 = arith.minimumf %137, %138 : vector<8x32xf32>
    %cst_35 = arith.constant 5.000000e-01 : f32
    %140 = vector.broadcast %cst_35 : f32 to vector<8x32xf32>
    %141 = arith.mulf %140, %139 : vector<8x32xf32>
    %142 = arith.subf %137, %141 : vector<8x32xf32>
    %143 = arith.mulf %139, %142 : vector<8x32xf32>
    %cst_36 = arith.constant dense<0.000000e+00> : vector<8xf32>
    %144 = vector.multi_reduction <add>, %143, %cst_36 [1] : vector<8x32xf32> to vector<8xf32>
    %145 = vector.shape_cast %144 : vector<8xf32> to vector<8x1xf32>
    %c8_i32_37 = arith.constant 8 : i32
    %146 = arith.muli %arg1, %c8_i32_37 : i32
    %147 = arith.addi %146, %c5_i32 : i32
    %148 = arith.index_cast %147 : i32 to index
    %149 = memref.load %arg2[%148] : memref<16xi32, #tpu.memory_space<smem>>
    %150 = vector.broadcast %149 : i32 to vector<8x1xi32>
    %151 = arith.cmpi eq, %6, %150 : vector<8x1xi32>
    %152 = arith.extui %151 : vector<8x1xi1> to vector<8x1xi32>
    %153 = arith.sitofp %152 : vector<8x1xi32> to vector<8x1xf32>
    %154 = arith.mulf %145, %153 : vector<8x1xf32>
    %155 = arith.addf %130, %154 : vector<8x1xf32>
    %156 = arith.subf %145, %154 : vector<8x1xf32>
    %157 = arith.addf %132, %156 : vector<8x1xf32>
    %c6_i32 = arith.constant 6 : i32
    %158 = arith.index_cast %c6_i32 : i32 to index
    %c0_38 = arith.constant 0 : index
    %159 = vector.load %arg9[%158, %c0_38] : memref<8x32xf32, #tpu.memory_space<vmem>>, vector<1x32xf32>
    %160 = vector.broadcast %159 : vector<1x32xf32> to vector<8x32xf32>
    %161 = arith.subf %5, %160 : vector<8x32xf32>
    %162 = math.absf %161 : vector<8x32xf32>
    %cst_39 = arith.constant 1.000000e+00 : f32
    %163 = vector.broadcast %cst_39 : f32 to vector<8x32xf32>
    %164 = arith.minimumf %162, %163 : vector<8x32xf32>
    %cst_40 = arith.constant 5.000000e-01 : f32
    %165 = vector.broadcast %cst_40 : f32 to vector<8x32xf32>
    %166 = arith.mulf %165, %164 : vector<8x32xf32>
    %167 = arith.subf %162, %166 : vector<8x32xf32>
    %168 = arith.mulf %164, %167 : vector<8x32xf32>
    %cst_41 = arith.constant dense<0.000000e+00> : vector<8xf32>
    %169 = vector.multi_reduction <add>, %168, %cst_41 [1] : vector<8x32xf32> to vector<8xf32>
    %170 = vector.shape_cast %169 : vector<8xf32> to vector<8x1xf32>
    %c8_i32_42 = arith.constant 8 : i32
    %171 = arith.muli %arg1, %c8_i32_42 : i32
    %172 = arith.addi %171, %c6_i32 : i32
    %173 = arith.index_cast %172 : i32 to index
    %174 = memref.load %arg2[%173] : memref<16xi32, #tpu.memory_space<smem>>
    %175 = vector.broadcast %174 : i32 to vector<8x1xi32>
    %176 = arith.cmpi eq, %6, %175 : vector<8x1xi32>
    %177 = arith.extui %176 : vector<8x1xi1> to vector<8x1xi32>
    %178 = arith.sitofp %177 : vector<8x1xi32> to vector<8x1xf32>
    %179 = arith.mulf %170, %178 : vector<8x1xf32>
    %180 = arith.addf %155, %179 : vector<8x1xf32>
    %181 = arith.subf %170, %179 : vector<8x1xf32>
    %182 = arith.addf %157, %181 : vector<8x1xf32>
    %c7_i32 = arith.constant 7 : i32
    %183 = arith.index_cast %c7_i32 : i32 to index
    %c0_43 = arith.constant 0 : index
    %184 = vector.load %arg9[%183, %c0_43] : memref<8x32xf32, #tpu.memory_space<vmem>>, vector<1x32xf32>
    %185 = vector.broadcast %184 : vector<1x32xf32> to vector<8x32xf32>
    %186 = arith.subf %5, %185 : vector<8x32xf32>
    %187 = math.absf %186 : vector<8x32xf32>
    %cst_44 = arith.constant 1.000000e+00 : f32
    %188 = vector.broadcast %cst_44 : f32 to vector<8x32xf32>
    %189 = arith.minimumf %187, %188 : vector<8x32xf32>
    %cst_45 = arith.constant 5.000000e-01 : f32
    %190 = vector.broadcast %cst_45 : f32 to vector<8x32xf32>
    %191 = arith.mulf %190, %189 : vector<8x32xf32>
    %192 = arith.subf %187, %191 : vector<8x32xf32>
    %193 = arith.mulf %189, %192 : vector<8x32xf32>
    %cst_46 = arith.constant dense<0.000000e+00> : vector<8xf32>
    %194 = vector.multi_reduction <add>, %193, %cst_46 [1] : vector<8x32xf32> to vector<8xf32>
    %195 = vector.shape_cast %194 : vector<8xf32> to vector<8x1xf32>
    %c8_i32_47 = arith.constant 8 : i32
    %196 = arith.muli %arg1, %c8_i32_47 : i32
    %197 = arith.addi %196, %c7_i32 : i32
    %198 = arith.index_cast %197 : i32 to index
    %199 = memref.load %arg2[%198] : memref<16xi32, #tpu.memory_space<smem>>
    %200 = vector.broadcast %199 : i32 to vector<8x1xi32>
    %201 = arith.cmpi eq, %6, %200 : vector<8x1xi32>
    %202 = arith.extui %201 : vector<8x1xi1> to vector<8x1xi32>
    %203 = arith.sitofp %202 : vector<8x1xi32> to vector<8x1xf32>
    %204 = arith.mulf %195, %203 : vector<8x1xf32>
    %205 = arith.addf %180, %204 : vector<8x1xf32>
    %206 = arith.subf %195, %204 : vector<8x1xf32>
    %207 = arith.addf %182, %206 : vector<8x1xf32>
    %c8_i32_48 = arith.constant 8 : i32
    %c0_49 = arith.constant 0 : index
    %c0_50 = arith.constant 0 : index
    %208 = vector.load %arg6[%c0_49, %c0_50] : memref<8x1xf32, #tpu.memory_space<vmem>>, vector<8x1xf32>
    %209 = arith.addf %208, %205 : vector<8x1xf32>
    %c0_51 = arith.constant 0 : index
    %c0_52 = arith.constant 0 : index
    %210 = vector.load %arg6[%c0_51, %c0_52] : memref<8x1xf32, #tpu.memory_space<vmem>>, vector<8x1xf32>
    tpu.vector_store %arg6[%c0_51, %c0_52], %209 {strides = array<i32>} : memref<8x1xf32, #tpu.memory_space<vmem>>, vector<8x1xf32>,
    %c0_53 = arith.constant 0 : index
    %c0_54 = arith.constant 0 : index
    %211 = vector.load %arg7[%c0_53, %c0_54] : memref<8x1xf32, #tpu.memory_space<vmem>>, vector<8x1xf32>
    %212 = arith.addf %211, %207 : vector<8x1xf32>
    %c0_55 = arith.constant 0 : index
    %c0_56 = arith.constant 0 : index
    %213 = vector.load %arg7[%c0_55, %c0_56] : memref<8x1xf32, #tpu.memory_space<vmem>>, vector<8x1xf32>
    tpu.vector_store %arg7[%c0_55, %c0_56], %212 {strides = array<i32>} : memref<8x1xf32, #tpu.memory_space<vmem>>, vector<8x1xf32>,
    return
  }
  func.func @transform_0(%arg0: i32, %arg1: i32) -> i32 {
    %c0_i32 = arith.constant 0 : i32
    %c0_i32_0 = arith.constant 0 : i32
    return %c0_i32 : i32
  }
  func.func @transform_1(%arg0: i32, %arg1: i32) -> (i32, i32) {
    %c0_i32 = arith.constant 0 : i32
    %c0_i32_0 = arith.constant 0 : i32
    return %arg0, %c0_i32 : i32, i32
  }
  func.func @transform_2(%arg0: i32, %arg1: i32) -> (i32, i32) {
    %c0_i32 = arith.constant 0 : i32
    %c0_i32_0 = arith.constant 0 : i32
    return %arg1, %c0_i32 : i32, i32
  }
  func.func @transform_3(%arg0: i32, %arg1: i32) -> (i32, i32) {
    %c0_i32 = arith.constant 0 : i32
    %c0_i32_0 = arith.constant 0 : i32
    return %arg0, %c0_i32 : i32, i32
  }
  func.func @transform_4(%arg0: i32, %arg1: i32) -> (i32, i32) {
    %c0_i32 = arith.constant 0 : i32
    %c0_i32_0 = arith.constant 0 : i32
    return %arg0, %c0_i32 : i32, i32
  }
  func.func @transform_5(%arg0: i32, %arg1: i32) -> (i32, i32) {
    %c0_i32 = arith.constant 0 : i32
    %c0_i32_0 = arith.constant 0 : i32
    return %arg0, %c0_i32 : i32, i32
  }
  func.func @transform_6(%arg0: i32, %arg1: i32) -> (i32, i32) {
    %c0_i32 = arith.constant 0 : i32
    %c0_i32_0 = arith.constant 0 : i32
    return %arg0, %c0_i32 : i32, i32
  }
}

</mosaic_0001>

<llo_original>
// kernel: tpu_custom_call.1
$region0: #{tpu_custom_call.1}
  #allocation0 [shape = 'u32[]', space=smem, size = 0x4, offset = 0x4, fixed_abs, tag = 'smem constant byte address 0x4 - core index']
  #allocation1 [shape = 'u32[144,128]{1,0:T(1,128)}', space=vmem, size = 0x12000, scoped, tag = 'internal scratch']
  #allocation2 [shape = 'f32[8,32]{1,0:T(8,128)}', space=vmem, size = 0x1000, scoped, tag = 'scratch operand']
  %s0 = inlined_call_operand.vmem [shape: s32[16], index: 0, kind: input, shape index: {}]
  %s1 = inlined_call_operand.vmem [shape: f32[16,32], index: 1, kind: input, shape index: {}]
  %s2 = inlined_call_operand.hbm [shape: f32[16,32], index: 2, kind: input, shape index: {}]
  %s3 = inlined_call_operand.vmem [shape: s32[16,1], index: 3, kind: input, shape index: {}]
  %s4 = inlined_call_operand.vmem [shape: f32[16,1], index: 4, kind: output, shape index: {0}]
  %s5 = inlined_call_operand.vmem [shape: f32[16,1], index: 5, kind: output, shape index: {1}]
  %s6 = inlined_call_operand.vmem [shape: f32[16,1], index: 6, kind: output, shape index: {2}]
  %7 = xla_tuple %s4, %s5, %s6
  %s8 = sld [smem:[#allocation0]]
  $region77: #{tpu_custom_call.1} parent=0
    _
  %s10 = ssub.s32 1, %s8
  %s11 = scalar_select 0, %s10, %s8
  $region1: #{tpu_custom_call.1} parent=0
    #allocation3 [shape = 'u8[512]{0}', space=smem, size = 0x200, scoped, tag = 'input window, operand 0, single buffered']
    #allocation4 [shape = 's32[2]{0}', space=sflag, size = 0x8, scoped, tag = 'scoped memory for tpu_custom_call.1']
    #allocation5 [shape = 's32[2]{0}', space=sflag, size = 0x8, scoped, tag = 'scoped memory for tpu_custom_call.1']
    #allocation6 [shape = 'u8[8192]{0}', space=vmem, size = 0x2000, scoped, tag = 'input window, operand 2']
    %12 = vsyncpa [#allocation5], 0
    %13 = vsyncpa [#allocation4], 0
    %s14 = scalar_lea.sflag [#allocation4], 1
    %15 = vsyncpa %s14, 0
    loop: start=0, step=1, limit=6
    $region2: #{tpu_custom_call.1} parent=1 // loop_pre_header
      _
    $region3: #{tpu_custom_call.1} parent=1 // loop_header
      %s17 = sphi 0, %s21
      %p18 = scmp.ge.s32.totalorder %s17, 6
      %s24 = sphi 0, %s36
      %s25 = sphi 0, %s32
      %s26 = sphi 0, %s24
      %s27 = sphi 0, %s25
      %s28 = sphi 0, %s26
      %s29 = sphi 0, %s27
      %s37 = sphi 0, %s37
      %s39 = sphi 0, %s37
      %s40 = sphi 0, %s39
      %s54 = sphi 0, %s40
      %s60 = sphi 0, %s62
      %s63 = sphi 0, %s60
      %s64 = sphi 0, %s63
      %s80 = sphi 0, %s64
      %s86 = sphi 0, %s88
      %s89 = sphi 0, %s86
      %s90 = sphi 0, %s89
      %s106 = sphi 0, %s90
      %s112 = sphi 0, %s114
      %s115 = sphi 0, %s112
      %s116 = sphi 0, %s115
      %s132 = sphi 0, %s116
      %s138 = sphi 0, %s140
      %s141 = sphi 0, %s138
      %s142 = sphi 0, %s141
      %s158 = sphi 0, %s142
      %s164 = sphi 0, %s166
      %s167 = sphi 0, %s164
      %s168 = sphi 0, %s167
      %s184 = sphi 0, %s168
      %s190 = sphi 0, %s192
      %s193 = sphi 0, %s190
      %s194 = sphi 0, %s193
      %s210 = sphi 0, %s194
    $region4: #{tpu_custom_call.1} parent=1 // loop_header_branch
      %20 = sbr.rel (%p18) target = $region8
    $region5: #{tpu_custom_call.1} parent=1 // loop_body
      %s22 = ssub.s32 %s17, 1
      %s23 = ssub.s32 %s17, 2
      %s30 = sadd.s32 1, %s25
      %p31 = scmp.ge.s32.totalorder %s30, 2
      %s32 = scalar_select %p31, 0, %s30
      %s33 = sadd.s32 1, %s24
      %s34 = scalar_select %p31, %s33, %s24
      %p35 = scmp.ge.s32.totalorder %s34, 2
      %s36 = scalar_select %p35, 0, %s34
      %s38 = sadd.s32 %s37, 1
      %p41 = scmp.eq.s32.totalorder %s17, 3
      %p42 = scmp.ne.s32.totalorder %s37, %s39
      %p43 = scmp.eq.s32.totalorder %s17, 0
      %p44 = por %p42, %p43
      %p45 = scmp.ne.s32.totalorder %s37, %s39
      %p46 = scmp.eq.s32.totalorder %s22, 3
      %p47 = por %p45, %p46
      %p48 = scmp.ne.s32.totalorder %s39, %s40
      %p49 = scmp.eq.s32.totalorder %s22, 0
      %p50 = por %p48, %p49
      %p51 = scmp.ne.s32.totalorder %s39, %s40
      %p52 = scmp.eq.s32.totalorder %s23, 3
      %p53 = por %p51, %p52
      %p55 = scmp.ne.s32.totalorder %s40, %s54
      %p56 = scmp.eq.s32.totalorder %s23, 0
      %p57 = por %p55, %p56
      %s58 = ssub.s32 %s24, %s36
      %p59 = scmp.eq.s32.totalorder %s58, 0
      %s61 = sadd.s32 %s60, 1
      %s62 = scalar_select %p59, %s60, %s61
      %p65 = pneg %p59
      %p66 = scmp.eq.s32.totalorder %s17, 3
      %p67 = por %p65, %p66
      %p68 = scmp.ne.s32.totalorder %s60, %s63
      %p69 = scmp.eq.s32.totalorder %s17, 0
      %p70 = por %p68, %p69
      %p71 = scmp.ne.s32.totalorder %s60, %s63
      %p72 = scmp.eq.s32.totalorder %s22, 3
      %p73 = por %p71, %p72
      %p74 = scmp.ne.s32.totalorder %s63, %s64
      %p75 = scmp.eq.s32.totalorder %s22, 0
      %p76 = por %p74, %p75
      %p77 = scmp.ne.s32.totalorder %s63, %s64
      %p78 = scmp.eq.s32.totalorder %s23, 3
      %p79 = por %p77, %p78
      %p81 = scmp.ne.s32.totalorder %s64, %s80
      %p82 = scmp.eq.s32.totalorder %s23, 0
      %p83 = por %p81, %p82
      %s84 = ssub.s32 %s25, %s32
      %p85 = scmp.eq.s32.totalorder %s84, 0
      %s87 = sadd.s32 %s86, 1
      %s88 = scalar_select %p85, %s86, %s87
      %p91 = pneg %p85
      %p92 = scmp.eq.s32.totalorder %s17, 3
      %p93 = por %p91, %p92
      %p94 = scmp.ne.s32.totalorder %s86, %s89
      %p95 = scmp.eq.s32.totalorder %s17, 0
      %p96 = por %p94, %p95
      %p97 = scmp.ne.s32.totalorder %s86, %s89
      %p98 = scmp.eq.s32.totalorder %s22, 3
      %p99 = por %p97, %p98
      %p100 = scmp.ne.s32.totalorder %s89, %s90
      %p101 = scmp.eq.s32.totalorder %s22, 0
      %p102 = por %p100, %p101
      %p103 = scmp.ne.s32.totalorder %s89, %s90
      %p104 = scmp.eq.s32.totalorder %s23, 3
      %p105 = por %p103, %p104
      %p107 = scmp.ne.s32.totalorder %s90, %s106
      %p108 = scmp.eq.s32.totalorder %s23, 0
      %p109 = por %p107, %p108
      %s110 = ssub.s32 %s24, %s36
      %p111 = scmp.eq.s32.totalorder %s110, 0
      %s113 = sadd.s32 %s112, 1
      %s114 = scalar_select %p111, %s112, %s113
      %p117 = pneg %p111
      %p118 = scmp.eq.s32.totalorder %s17, 3
      %p119 = por %p117, %p118
      %p120 = scmp.ne.s32.totalorder %s112, %s115
      %p121 = scmp.eq.s32.totalorder %s17, 0
      %p122 = por %p120, %p121
      %p123 = scmp.ne.s32.totalorder %s112, %s115
      %p124 = scmp.eq.s32.totalorder %s22, 3
      %p125 = por %p123, %p124
      %p126 = scmp.ne.s32.totalorder %s115, %s116
      %p127 = scmp.eq.s32.totalorder %s22, 0
      %p128 = por %p126, %p127
      %p129 = scmp.ne.s32.totalorder %s115, %s116
      %p130 = scmp.eq.s32.totalorder %s23, 3
      %p131 = por %p129, %p130
      %p133 = scmp.ne.s32.totalorder %s116, %s132
      %p134 = scmp.eq.s32.totalorder %s23, 0
      %p135 = por %p133, %p134
      %s136 = ssub.s32 %s24, %s36
      %p137 = scmp.eq.s32.totalorder %s136, 0
      %s139 = sadd.s32 %s138, 1
      %s140 = scalar_select %p137, %s138, %s139
      %p143 = pneg %p137
      %p144 = scmp.eq.s32.totalorder %s17, 3
      %p145 = por %p143, %p144
      %p146 = scmp.ne.s32.totalorder %s138, %s141
      %p147 = scmp.eq.s32.totalorder %s17, 0
      %p148 = por %p146, %p147
      %p149 = scmp.ne.s32.totalorder %s138, %s141
      %p150 = scmp.eq.s32.totalorder %s22, 3
      %p151 = por %p149, %p150
      %p152 = scmp.ne.s32.totalorder %s141, %s142
      %p153 = scmp.eq.s32.totalorder %s22, 0
      %p154 = por %p152, %p153
      %p155 = scmp.ne.s32.totalorder %s141, %s142
      %p156 = scmp.eq.s32.totalorder %s23, 3
      %p157 = por %p155, %p156
      %p159 = scmp.ne.s32.totalorder %s142, %s158
      %p160 = scmp.eq.s32.totalorder %s23, 0
      %p161 = por %p159, %p160
      %s162 = ssub.s32 %s24, %s36
      %p163 = scmp.eq.s32.totalorder %s162, 0
      %s165 = sadd.s32 %s164, 1
      %s166 = scalar_select %p163, %s164, %s165
      %p169 = pneg %p163
      %p170 = scmp.eq.s32.totalorder %s17, 3
      %p171 = por %p169, %p170
      %p172 = scmp.ne.s32.totalorder %s164, %s167
      %p173 = scmp.eq.s32.totalorder %s17, 0
      %p174 = por %p172, %p173
      %p175 = scmp.ne.s32.totalorder %s164, %s167
      %p176 = scmp.eq.s32.totalorder %s22, 3
      %p177 = por %p175, %p176
      %p178 = scmp.ne.s32.totalorder %s167, %s168
      %p179 = scmp.eq.s32.totalorder %s22, 0
      %p180 = por %p178, %p179
      %p181 = scmp.ne.s32.totalorder %s167, %s168
      %p182 = scmp.eq.s32.totalorder %s23, 3
      %p183 = por %p181, %p182
      %p185 = scmp.ne.s32.totalorder %s168, %s184
      %p186 = scmp.eq.s32.totalorder %s23, 0
      %p187 = por %p185, %p186
      %s188 = ssub.s32 %s24, %s36
      %p189 = scmp.eq.s32.totalorder %s188, 0
      %s191 = sadd.s32 %s190, 1
      %s192 = scalar_select %p189, %s190, %s191
      %p195 = pneg %p189
      %p196 = scmp.eq.s32.totalorder %s17, 3
      %p197 = por %p195, %p196
      %p198 = scmp.ne.s32.totalorder %s190, %s193
      %p199 = scmp.eq.s32.totalorder %s17, 0
      %p200 = por %p198, %p199
      %p201 = scmp.ne.s32.totalorder %s190, %s193
      %p202 = scmp.eq.s32.totalorder %s22, 3
      %p203 = por %p201, %p202
      %p204 = scmp.ne.s32.totalorder %s193, %s194
      %p205 = scmp.eq.s32.totalorder %s22, 0
      %p206 = por %p204, %p205
      %p207 = scmp.ne.s32.totalorder %s193, %s194
      %p208 = scmp.eq.s32.totalorder %s23, 3
      %p209 = por %p207, %p208
      %p211 = scmp.ne.s32.totalorder %s194, %s210
      %p212 = scmp.eq.s32.totalorder %s23, 0
      %p213 = por %p211, %p212
      %p214 = scmp.le.s32.totalorder 1, %s17
      %p215 = scmp.lt.s32.totalorder %s17, 5
      %p216 = pnand %p214, %p215
      %p217 = pneg %p216
      // Predicated region
      $region9: #{tpu_custom_call.1} parent=5 // pred_check
        _
      $region10: #{tpu_custom_call.1} parent=5 // pred_check_branch
        %219 = sbr.rel (%p216) target = $region12
      $region11: #{tpu_custom_call.1} parent=5 // pred_region
        %s220 = ssub.s32 %s17, 1
        // Predicated region
        $region13: #{tpu_custom_call.1} parent=11 // pred_check
          %p221 = pneg %p50
        $region14: #{tpu_custom_call.1} parent=11 // pred_check_branch
          %223 = sbr.rel (%p221) target = $region16
        $region15: #{tpu_custom_call.1} parent=11 // pred_region
          %s225 = ssub.s32 16, 16
          %226 = vsyncadd [#allocation5], %s225
          %s228 = sshll.u32 %s0, 4
          %s229 = int_to_ptr.vmem [resolvable:$true] %s228
          %231 = dma.vmem_to_smem %s229, 16, [#allocation3], [#allocation5]
        $region16: #{tpu_custom_call.1} parent=11 // pred_fallthru
          _
      $region12: #{tpu_custom_call.1} parent=5 // pred_fallthru
        _
      %p232 = scmp.lt.s32.totalorder %s17, 4
      // Predicated region
      $region17: #{tpu_custom_call.1} parent=5 // pred_check
        %p233 = pneg %p232
      $region18: #{tpu_custom_call.1} parent=5 // pred_check_branch
        %235 = sbr.rel (%p233) target = $region20
      $region19: #{tpu_custom_call.1} parent=5 // pred_region
        // Predicated region
        $region21: #{tpu_custom_call.1} parent=19 // pred_check
          %p236 = pneg %p70
        $region22: #{tpu_custom_call.1} parent=19 // pred_check_branch
          %238 = sbr.rel (%p236) target = $region24
        $region23: #{tpu_custom_call.1} parent=19 // pred_region
          %p239 = scmp.lt.s32.totalorder %s24, 1
          %s240 = scalar_select %p239, %s24, 1
          %s241 = smul.addr %s240, 8
          %s242 = scalar_lea.vmem %s1, %s241
        $region24: #{tpu_custom_call.1} parent=19 // pred_fallthru
          _
        // Predicated region
        $region25: #{tpu_custom_call.1} parent=19 // pred_check
          %p243 = pneg %p96
        $region26: #{tpu_custom_call.1} parent=19 // pred_check_branch
          %245 = sbr.rel (%p243) target = $region28
        $region27: #{tpu_custom_call.1} parent=19 // pred_region
          %s246 = sand.u32 %s86, 1
          %s247 = scalar_lea.sflag [#allocation4], %s246
          %s248 = sand.u32 %s86, 1
          %s249 = smul.addr %s248, 8
          %s250 = scalar_lea.vmem [#allocation6], %s249
          %s252 = ssub.s32 128, 128
          %253 = vsyncadd %s247, %s252
          %s254 = smul.addr %s25, 128
          %s255 = scalar_lea.hbm %s2, %s254
          %s257 = sshll.u32 %s250, 4
          %s258 = int_to_ptr.vmem [resolvable:$true] %s257
          %260 = dma.hbm_to_vmem [thread:$0]  %s255, 128, %s258, %s247
        $region28: #{tpu_custom_call.1} parent=19 // pred_fallthru
          _
        // Predicated region
        $region29: #{tpu_custom_call.1} parent=19 // pred_check
          %p261 = pneg %p122
        $region30: #{tpu_custom_call.1} parent=19 // pred_check_branch
          %263 = sbr.rel (%p261) target = $region32
        $region31: #{tpu_custom_call.1} parent=19 // pred_region
          %p264 = scmp.lt.s32.totalorder %s24, 1
          %s265 = scalar_select %p264, %s24, 1
          %s266 = smul.addr %s265, 8
          %s267 = scalar_lea.vmem %s3, %s266
        $region32: #{tpu_custom_call.1} parent=19 // pred_fallthru
          _
      $region20: #{tpu_custom_call.1} parent=5 // pred_fallthru
        _
      %p268 = scmp.le.s32.totalorder 1, %s17
      %p269 = scmp.lt.s32.totalorder %s17, 5
      %p270 = pnand %p268, %p269
      %p271 = pneg %p270
      // Predicated region
      $region33: #{tpu_custom_call.1} parent=5 // pred_check
        _
      $region34: #{tpu_custom_call.1} parent=5 // pred_check_branch
        %273 = sbr.rel (%p270) target = $region36
      $region35: #{tpu_custom_call.1} parent=5 // pred_region
        %s274 = ssub.s32 %s17, 1
        // Predicated region
        $region37: #{tpu_custom_call.1} parent=35 // pred_check
          %p275 = pneg %p50
        $region38: #{tpu_custom_call.1} parent=35 // pred_check_branch
          %277 = sbr.rel (%p275) target = $region40
        $region39: #{tpu_custom_call.1} parent=35 // pred_region
          %278 = dma.done [#allocation5], 16
        $region40: #{tpu_custom_call.1} parent=35 // pred_fallthru
          _
        %s279 = sand.u32 %s89, 1
        %s280 = scalar_lea.sflag [#allocation4], %s279
        %s281 = sand.u32 %s89, 1
        %s282 = smul.addr %s281, 8
        %s283 = scalar_lea.vmem [#allocation6], %s282
        // Predicated region
        $region41: #{tpu_custom_call.1} parent=35 // pred_check
          %p284 = pneg %p102
        $region42: #{tpu_custom_call.1} parent=35 // pred_check_branch
          %286 = sbr.rel (%p284) target = $region44
        $region43: #{tpu_custom_call.1} parent=35 // pred_region
          %287 = dma.done %s280, 128
        $region44: #{tpu_custom_call.1} parent=35 // pred_fallthru
          _
        %288 = sfence
        %p289 = pneg %p50
        %p290 = pneg %p47
        %p291 = scmp.lt.s32.totalorder %s26, 1
        %s292 = scalar_select %p291, %s26, 1
        %s293 = smul.addr %s292, 8
        %s294 = scalar_lea.vmem %s1, %s293
        %p295 = pneg %p76
        %p296 = pneg %p73
        %s297 = sand.u32 %s89, 1
        %s298 = scalar_lea.sflag [#allocation4], %s297
        %s299 = sand.u32 %s89, 1
        %s300 = smul.addr %s299, 8
        %s301 = scalar_lea.vmem [#allocation6], %s300
        %p302 = pneg %p102
        %p303 = pneg %p99
        %p304 = scmp.lt.s32.totalorder %s26, 1
        %s305 = scalar_select %p304, %s26, 1
        %s306 = smul.addr %s305, 8
        %s307 = scalar_lea.vmem %s3, %s306
        %p308 = pneg %p128
        %p309 = pneg %p125
        %p310 = pneg %p154
        %p311 = pneg %p151
        %p312 = scmp.lt.s32.totalorder %s26, 1
        %s313 = scalar_select %p312, %s26, 1
        %s314 = smul.addr %s313, 8
        %s315 = scalar_lea.vmem %s4, %s314
        %p316 = pneg %p180
        %p317 = pneg %p177
        %p318 = scmp.lt.s32.totalorder %s26, 1
        %s319 = scalar_select %p318, %s26, 1
        %s320 = smul.addr %s319, 8
        %s321 = scalar_lea.vmem %s5, %s320
        %p322 = pneg %p206
        %p323 = pneg %p203
        %p324 = scmp.lt.s32.totalorder %s26, 1
        %s325 = scalar_select %p324, %s26, 1
        %s326 = smul.addr %s325, 8
        %s327 = scalar_lea.vmem %s6, %s326
        %p328 = scmp.lt.s32.totalorder %s26, 1
        %s329 = scalar_select %p328, %s26, 1
        %s330 = smul.addr %s329, 8
        %s331 = scalar_lea.vmem %s1, %s330
        %p332 = scmp.lt.s32.totalorder %s26, 1
        %s333 = scalar_select %p332, %s26, 1
        %s334 = smul.addr %s333, 8
        %s335 = scalar_lea.vmem %s3, %s334
        %p336 = scmp.lt.s32.totalorder %s26, 1
        %s337 = scalar_select %p336, %s26, 1
        %s338 = smul.addr %s337, 8
        %s339 = scalar_lea.vmem %s4, %s338
        %p340 = scmp.lt.s32.totalorder %s26, 1
        %s341 = scalar_select %p340, %s26, 1
        %s342 = smul.addr %s341, 8
        %s343 = scalar_lea.vmem %s5, %s342
        %p344 = scmp.lt.s32.totalorder %s26, 1
        %s345 = scalar_select %p344, %s26, 1
        %s346 = smul.addr %s345, 8
        %s347 = scalar_lea.vmem %s6, %s346
        %p348 = scmp.eq.s32.totalorder %s27, 0
        // Predicated region
        $region45: #{tpu_custom_call.1} parent=35 // pred_check
          %p349 = pneg %p348
        $region46: #{tpu_custom_call.1} parent=35 // pred_check_branch
          %351 = sbr.rel (%p349) target = $region48
        $region47: #{tpu_custom_call.1} parent=35 // pred_region
          %vm352 = vcmask 7168
          %353 = vst.msk [vmem:[%s339] sm:$0xff] %vm352, 0.0
          %354 = vst.msk [vmem:[%s343] sm:$0xff] %vm352, 0.0
          %v355 = vld [vmem:[%s331] sm:$0xff]
          %v356 = vmul.f32 %v355, %v355
          %vm357 = vcmask 261120
          %v358 = vsel %vm357, %v356, 0.0
          %359 = vadd.xlane.f32.xlu0 %v358
          %v360 = vpop.xlane.xlu0 %359
          %v361 = vrsqrt.pop %v360
          %v362 = vmul.f32 %v360, %v361
          %vm363 = vcmp.eq.f32.partialorder %v360, inf
          %v364 = vsel %vm363, %v360, %v362
          %vm365 = vcmp.eq.f32.partialorder %v360, 0.0
          %v366 = vand.u32 %v360, 2147483648
          %v367 = vsel %vm365, %v366, %v364
          %v368 = vsub.f32 %v367, 10.0
          %v369 = vmul.f32 %v368, %v368
          %370 = vst.msk [vmem:[%s347] sm:$0xff] %vm352, %v369
        $region48: #{tpu_custom_call.1} parent=35 // pred_fallthru
          _
        %v371 = vld [vmem:[%s283] sm:$0xff]
        %vm372 = vcmask 261120
        %373 = vst.msk [vmem:[#allocation2] sm:$0xff] %vm372, %v371
        %v374 = vld [vmem:[%s331] sm:$0xff]
        %v375 = vld [vmem:[%s335] sm:$0xff]
        %v376 = vld [vmem:[#allocation2] sm:$0x1]
        %v377 = vlaneseq
        %v378 = vshrl.u32 %v377, 7
        %v379 = vsub.s32 0, %v378
        %v380 = vrot.slane %v376, %v379
        %v381 = vsub.f32 %v374, %v380
        %v382 = vand.u32 2147483647, %v381
        %v383 = vmin.f32 %v382, 1.0
        %v384 = vmul.f32 %v383, 0.5
        %v385 = vsub.f32 %v382, %v384
        %v386 = vmul.f32 %v383, %v385
        %v387 = vsel %vm372, %v386, 0.0
        %388 = vadd.xlane.f32.xlu0 %v387
        %v389 = vpop.xlane.xlu0 %388
        %s390 = smul.u32 %s27, 8
        %s391 = sld [smem:[#allocation3 + %s390]]
        %v392 = vstv %s391
        %vm393 = vcmp.eq.s32.totalorder %v375, %v392
        %v394 = vsel %vm393, 1, 0
        %v395 = vcvt.s32.f32 %v394
        %v396 = vmul.f32 %v389, %v395
        %v397 = vadd.f32 %v396, 0.0
        %v398 = vsub.f32 %v389, %v396
        %v399 = vadd.f32 %v398, 0.0
        %v400 = vld [vmem:[#allocation2 + $0x1] sm:$0x1]
        %v401 = vlaneseq
        %v402 = vshrl.u32 %v401, 7
        %v403 = vsub.s32 0, %v402
        %v404 = vrot.slane %v400, %v403
        %v405 = vsub.f32 %v374, %v404
        %v406 = vand.u32 2147483647, %v405
        %v407 = vmin.f32 %v406, 1.0
        %v408 = vmul.f32 %v407, 0.5
        %v409 = vsub.f32 %v406, %v408
        %v410 = vmul.f32 %v407, %v409
        %v411 = vsel %vm372, %v410, 0.0
        %412 = vadd.xlane.f32.xlu0 %v411
        %v413 = vpop.xlane.xlu0 %412
        %s414 = sadd.s32 %s390, 1
        %s415 = sld [smem:[#allocation3 + %s414]]
        %v416 = vstv %s415
        %vm417 = vcmp.eq.s32.totalorder %v375, %v416
        %v418 = vsel %vm417, 1, 0
        %v419 = vcvt.s32.f32 %v418
        %v420 = vmul.f32 %v413, %v419
        %v421 = vadd.f32 %v397, %v420
        %v422 = vsub.f32 %v413, %v420
        %v423 = vadd.f32 %v399, %v422
        %v424 = vld [vmem:[#allocation2 + $0x2] sm:$0x1]
        %v425 = vlaneseq
        %v426 = vshrl.u32 %v425, 7
        %v427 = vsub.s32 0, %v426
        %v428 = vrot.slane %v424, %v427
        %v429 = vsub.f32 %v374, %v428
        %v430 = vand.u32 2147483647, %v429
        %v431 = vmin.f32 %v430, 1.0
        %v432 = vmul.f32 %v431, 0.5
        %v433 = vsub.f32 %v430, %v432
        %v434 = vmul.f32 %v431, %v433
        %v435 = vsel %vm372, %v434, 0.0
        %436 = vadd.xlane.f32.xlu0 %v435
        %v437 = vpop.xlane.xlu0 %436
        %s438 = sadd.s32 %s390, 2
        %s439 = sld [smem:[#allocation3 + %s438]]
        %v440 = vstv %s439
        %vm441 = vcmp.eq.s32.totalorder %v375, %v440
        %v442 = vsel %vm441, 1, 0
        %v443 = vcvt.s32.f32 %v442
        %v444 = vmul.f32 %v437, %v443
        %v445 = vadd.f32 %v421, %v444
        %v446 = vsub.f32 %v437, %v444
        %v447 = vadd.f32 %v423, %v446
        %v448 = vld [vmem:[#allocation2 + $0x3] sm:$0x1]
        %v449 = vlaneseq
        %v450 = vshrl.u32 %v449, 7
        %v451 = vsub.s32 0, %v450
        %v452 = vrot.slane %v448, %v451
        %v453 = vsub.f32 %v374, %v452
        %v454 = vand.u32 2147483647, %v453
        %v455 = vmin.f32 %v454, 1.0
        %v456 = vmul.f32 %v455, 0.5
        %v457 = vsub.f32 %v454, %v456
        %v458 = vmul.f32 %v455, %v457
        %v459 = vsel %vm372, %v458, 0.0
        %460 = vadd.xlane.f32.xlu0 %v459
        %v461 = vpop.xlane.xlu0 %460
        %s462 = sadd.s32 %s390, 3
        %s463 = sld [smem:[#allocation3 + %s462]]
        %v464 = vstv %s463
        %vm465 = vcmp.eq.s32.totalorder %v375, %v464
        %v466 = vsel %vm465, 1, 0
        %v467 = vcvt.s32.f32 %v466
        %v468 = vmul.f32 %v461, %v467
        %v469 = vadd.f32 %v445, %v468
        %v470 = vsub.f32 %v461, %v468
        %v471 = vadd.f32 %v447, %v470
        %v472 = vld [vmem:[#allocation2 + $0x4] sm:$0x1]
        %v473 = vlaneseq
        %v474 = vshrl.u32 %v473, 7
        %v475 = vsub.s32 0, %v474
        %v476 = vrot.slane %v472, %v475
        %v477 = vsub.f32 %v374, %v476
        %v478 = vand.u32 2147483647, %v477
        %v479 = vmin.f32 %v478, 1.0
        %v480 = vmul.f32 %v479, 0.5
        %v481 = vsub.f32 %v478, %v480
        %v482 = vmul.f32 %v479, %v481
        %v483 = vsel %vm372, %v482, 0.0
        %484 = vadd.xlane.f32.xlu0 %v483
        %v485 = vpop.xlane.xlu0 %484
        %s486 = sadd.s32 %s390, 4
        %s487 = sld [smem:[#allocation3 + %s486]]
        %v488 = vstv %s487
        %vm489 = vcmp.eq.s32.totalorder %v375, %v488
        %v490 = vsel %vm489, 1, 0
        %v491 = vcvt.s32.f32 %v490
        %v492 = vmul.f32 %v485, %v491
        %v493 = vadd.f32 %v469, %v492
        %v494 = vsub.f32 %v485, %v492
        %v495 = vadd.f32 %v471, %v494
        %v496 = vld [vmem:[#allocation2 + $0x5] sm:$0x1]
        %v497 = vlaneseq
        %v498 = vshrl.u32 %v497, 7
        %v499 = vsub.s32 0, %v498
        %v500 = vrot.slane %v496, %v499
        %v501 = vsub.f32 %v374, %v500
        %v502 = vand.u32 2147483647, %v501
        %v503 = vmin.f32 %v502, 1.0
        %v504 = vmul.f32 %v503, 0.5
        %v505 = vsub.f32 %v502, %v504
        %v506 = vmul.f32 %v503, %v505
        %v507 = vsel %vm372, %v506, 0.0
        %508 = vadd.xlane.f32.xlu0 %v507
        %v509 = vpop.xlane.xlu0 %508
        %s510 = sadd.s32 %s390, 5
        %s511 = sld [smem:[#allocation3 + %s510]]
        %v512 = vstv %s511
        %vm513 = vcmp.eq.s32.totalorder %v375, %v512
        %v514 = vsel %vm513, 1, 0
        %v515 = vcvt.s32.f32 %v514
        %v516 = vmul.f32 %v509, %v515
        %v517 = vadd.f32 %v493, %v516
        %v518 = vsub.f32 %v509, %v516
        %v519 = vadd.f32 %v495, %v518
        %v520 = vld [vmem:[#allocation2 + $0x6] sm:$0x1]
        %v521 = vlaneseq
        %v522 = vshrl.u32 %v521, 7
        %v523 = vsub.s32 0, %v522
        %v524 = vrot.slane %v520, %v523
        %v525 = vsub.f32 %v374, %v524
        %v526 = vand.u32 2147483647, %v525
        %v527 = vmin.f32 %v526, 1.0
        %v528 = vmul.f32 %v527, 0.5
        %v529 = vsub.f32 %v526, %v528
        %v530 = vmul.f32 %v527, %v529
        %v531 = vsel %vm372, %v530, 0.0
        %532 = vadd.xlane.f32.xlu0 %v531
        %v533 = vpop.xlane.xlu0 %532
        %s534 = sadd.s32 %s390, 6
        %s535 = sld [smem:[#allocation3 + %s534]]
        %v536 = vstv %s535
        %vm537 = vcmp.eq.s32.totalorder %v375, %v536
        %v538 = vsel %vm537, 1, 0
        %v539 = vcvt.s32.f32 %v538
        %v540 = vmul.f32 %v533, %v539
        %v541 = vadd.f32 %v517, %v540
        %v542 = vsub.f32 %v533, %v540
        %v543 = vadd.f32 %v519, %v542
        %v544 = vld [vmem:[#allocation2 + $0x7] sm:$0x1]
        %v545 = vlaneseq
        %v546 = vshrl.u32 %v545, 7
        %v547 = vsub.s32 0, %v546
        %v548 = vrot.slane %v544, %v547
        %v549 = vsub.f32 %v374, %v548
        %v550 = vand.u32 2147483647, %v549
        %v551 = vmin.f32 %v550, 1.0
        %v552 = vmul.f32 %v551, 0.5
        %v553 = vsub.f32 %v550, %v552
        %v554 = vmul.f32 %v551, %v553
        %v555 = vsel %vm372, %v554, 0.0
        %556 = vadd.xlane.f32.xlu0 %v555
        %v557 = vpop.xlane.xlu0 %556
        %s558 = sadd.s32 %s390, 7
        %s559 = sld [smem:[#allocation3 + %s558]]
        %v560 = vstv %s559
        %vm561 = vcmp.eq.s32.totalorder %v375, %v560
        %v562 = vsel %vm561, 1, 0
        %v563 = vcvt.s32.f32 %v562
        %v564 = vmul.f32 %v557, %v563
        %v565 = vadd.f32 %v541, %v564
        %v566 = vsub.f32 %v557, %v564
        %v567 = vadd.f32 %v543, %v566
        %v568 = vld [vmem:[%s339] sm:$0xff]
        %v569 = vadd.f32 %v568, %v565
        %vm570 = vcmask 7168
        %571 = vst.msk [vmem:[%s339] sm:$0xff] %vm570, %v569
        %v572 = vld [vmem:[%s343] sm:$0xff]
        %v573 = vadd.f32 %v572, %v567
        %574 = vst.msk [vmem:[%s343] sm:$0xff] %vm570, %v573
        %p575 = scmp.lt.s32.totalorder %s26, 1
        %s576 = scalar_select %p575, %s26, 1
        %s577 = smul.addr %s576, 8
        %s578 = scalar_lea.vmem %s4, %s577
        %p579 = scmp.lt.s32.totalorder %s26, 1
        %s580 = scalar_select %p579, %s26, 1
        %s581 = smul.addr %s580, 8
        %s582 = scalar_lea.vmem %s5, %s581
        %p583 = scmp.lt.s32.totalorder %s26, 1
        %s584 = scalar_select %p583, %s26, 1
        %s585 = smul.addr %s584, 8
        %s586 = scalar_lea.vmem %s6, %s585
        // Predicated region
        $region49: #{tpu_custom_call.1} parent=35 // pred_check
          %p587 = pneg %p151
        $region50: #{tpu_custom_call.1} parent=35 // pred_check_branch
          %589 = sbr.rel (%p587) target = $region52
        $region51: #{tpu_custom_call.1} parent=35 // pred_region
          _
        $region52: #{tpu_custom_call.1} parent=35 // pred_fallthru
          _
        // Predicated region
        $region53: #{tpu_custom_call.1} parent=35 // pred_check
          %p590 = pneg %p177
        $region54: #{tpu_custom_call.1} parent=35 // pred_check_branch
          %592 = sbr.rel (%p590) target = $region56
        $region55: #{tpu_custom_call.1} parent=35 // pred_region
          _
        $region56: #{tpu_custom_call.1} parent=35 // pred_fallthru
          _
        // Predicated region
        $region57: #{tpu_custom_call.1} parent=35 // pred_check
          %p593 = pneg %p203
        $region58: #{tpu_custom_call.1} parent=35 // pred_check_branch
          %595 = sbr.rel (%p593) target = $region60
        $region59: #{tpu_custom_call.1} parent=35 // pred_region
          _
        $region60: #{tpu_custom_call.1} parent=35 // pred_fallthru
          _
      $region36: #{tpu_custom_call.1} parent=5 // pred_fallthru
        _
      %p596 = scmp.le.s32.totalorder 2, %s17
      // Predicated region
      $region61: #{tpu_custom_call.1} parent=5 // pred_check
        %p597 = pneg %p596
      $region62: #{tpu_custom_call.1} parent=5 // pred_check_branch
        %599 = sbr.rel (%p597) target = $region64
      $region63: #{tpu_custom_call.1} parent=5 // pred_region
        %s600 = ssub.s32 %s17, 2
        // Predicated region
        $region65: #{tpu_custom_call.1} parent=63 // pred_check
          %p601 = pneg %p157
        $region66: #{tpu_custom_call.1} parent=63 // pred_check_branch
          %603 = sbr.rel (%p601) target = $region68
        $region67: #{tpu_custom_call.1} parent=63 // pred_region
          %p604 = scmp.lt.s32.totalorder %s28, 1
          %s605 = scalar_select %p604, %s28, 1
          %s606 = smul.addr %s605, 8
          %s607 = scalar_lea.vmem %s4, %s606
        $region68: #{tpu_custom_call.1} parent=63 // pred_fallthru
          _
        // Predicated region
        $region69: #{tpu_custom_call.1} parent=63 // pred_check
          %p608 = pneg %p183
        $region70: #{tpu_custom_call.1} parent=63 // pred_check_branch
          %610 = sbr.rel (%p608) target = $region72
        $region71: #{tpu_custom_call.1} parent=63 // pred_region
          %p611 = scmp.lt.s32.totalorder %s28, 1
          %s612 = scalar_select %p611, %s28, 1
          %s613 = smul.addr %s612, 8
          %s614 = scalar_lea.vmem %s5, %s613
        $region72: #{tpu_custom_call.1} parent=63 // pred_fallthru
          _
        // Predicated region
        $region73: #{tpu_custom_call.1} parent=63 // pred_check
          %p615 = pneg %p209
        $region74: #{tpu_custom_call.1} parent=63 // pred_check_branch
          %617 = sbr.rel (%p615) target = $region76
        $region75: #{tpu_custom_call.1} parent=63 // pred_region
          %p618 = scmp.lt.s32.totalorder %s28, 1
          %s619 = scalar_select %p618, %s28, 1
          %s620 = smul.addr %s619, 8
          %s621 = scalar_lea.vmem %s6, %s620
        $region76: #{tpu_custom_call.1} parent=63 // pred_fallthru
          _
      $region64: #{tpu_custom_call.1} parent=5 // pred_fallthru
        _
    $region6: #{tpu_custom_call.1} parent=1 // loop_footer
      %s21 = sadd.s32 1, %s17
    $region7: #{tpu_custom_call.1} parent=1 // loop_footer_branch
      %16 = sbr.rel target = $region3
    $region8: #{tpu_custom_call.1} parent=1 // loop_exit
      _
    %622 = vsyncpa [#allocation4], 1
    %s623 = scalar_lea.sflag [#allocation4], 1
    %624 = vsyncpa %s623, 1
    %625 = vsyncpa [#allocation5], 1
    %s626 = scalar_lea.sflag [#allocation5], 1
    %627 = vsyncpa %s626, 1

</llo_original>
